<compile_context>
chip_gen: v7x
topology: tpu7x:2x2x1
jax: 0.10.0
libtpu: 0.0.40
codegen_flags: <defaults>
</compile_context>

<pallas_src>
import jax
import jax.numpy as jnp
from jax.experimental import pallas as pl
from jax.experimental.pallas import tpu as pltpu


def _round_up(x, m):
    return ((x + m - 1) // m) * m


def _fm_kernel_reduce(x_ref, s_ref, o_ref):
    # x_ref: (tb, F*D) native dtype; s_ref: (F*D, D) 0/1 in x.dtype; o_ref: (tb, 1)
    x = x_ref[...]
    # Field sum on the MXU with f32 accumulation: s[b, d] = sum_f x[b, f, d]
    s = jnp.dot(x, s_ref[...], preferred_element_type=jnp.float32)        # (tb, D) f32
    sq_of_sum = jnp.sum(s * s, axis=1, keepdims=True)                     # (tb, 1) f32
    sum_of_sq = jnp.sum(x * x, axis=1, keepdims=True, dtype=jnp.float32)  # (tb, 1) f32
    o_ref[...] = (0.5 * (sq_of_sum - sum_of_sq)).astype(o_ref.dtype)


def _fm_kernel_no_reduce(x_ref, s_ref, o_ref):
    # x_ref: (tb, F*D); s_ref: (F*D, D); o_ref: (tb, D)
    x = x_ref[...]
    S = s_ref[...]
    s = jnp.dot(x, S, preferred_element_type=jnp.float32)                 # (tb, D) f32
    sum_of_sq = jnp.dot(x * x, S, preferred_element_type=jnp.float32)     # (tb, D) f32
    o_ref[...] = (0.5 * (s * s - sum_of_sq)).astype(o_ref.dtype)


def factorization_machine(x, reduce_sum=True, block_batch=None):
    """FM second-order interaction. x: (B, F, D). Returns (B, 1) or (B, D)."""
    B, F, D = x.shape
    FD = F * D
    itemsize = jnp.dtype(x.dtype).itemsize
    out_dtype = x.dtype
    out_cols = 1 if reduce_sum else D

    # Contiguous flatten of field/embed dims onto the lane axis (free, lane-dense).
    x2d = x.reshape(B, FD)

    # ---- generation-aware targets ------------------------------------------
    kind = ""
    try:
        kind = jax.devices()[0].device_kind.lower()
    except Exception:
        pass
    if "v7" in kind:        # 64 MiB physical VMEM, ~3.2 TB/s HBM, 2 TensorCores
        vmem_cap, target_in_bytes, multicore = 52 << 20, 14 << 20, True
    elif "v6" in kind:      # 128 MiB VMEM, ~1.4 TB/s HBM
        vmem_cap, target_in_bytes, multicore = 96 << 20, 10 << 20, False
    elif "v5" in kind:      # 128 MiB VMEM, ~0.8 TB/s HBM
        vmem_cap, target_in_bytes, multicore = 96 << 20, 6 << 20, False
    else:                   # unknown chip: stay conservative
        vmem_cap, target_in_bytes, multicore = 48 << 20, 6 << 20, False

    # ---- VMEM accounting (includes 128-lane padding of narrow buffers) ------
    lane_fd = _round_up(FD, 128)
    lane_d = _round_up(D, 128)
    lane_out = _round_up(out_cols, 128)
    sub_mult = 8 * max(1, 4 // itemsize)              # sublane multiple per dtype
    per_row_bytes = (
        2 * lane_fd * itemsize                        # double-buffered input tile
        + 2 * lane_out * itemsize                     # double-buffered output tile
        + lane_fd * itemsize                          # x*x elementwise temp (native dtype)
        + (2 * lane_d + 2 * 128) * 4                  # small f32 per-row temporaries
    )
    fixed_bytes = 2 * _round_up(FD, sub_mult) * lane_d * itemsize   # S (double-buffered)
    headroom = 4 << 20

    rows_budget = max(8, ((vmem_cap - headroom - fixed_bytes) // per_row_bytes) // 8 * 8)
    B_pad8 = _round_up(B, 8)

    if block_batch is None:
        rows_target = max(8, (target_in_bytes // (FD * itemsize)) // 8 * 8)
        block_batch = min(rows_target, rows_budget, B_pad8)
    else:
        # Clamp caller-supplied block to the VMEM budget (never exceed the limit).
        block_batch = min(max(8, (int(block_batch) // 8) * 8), rows_budget, B_pad8)
    block_batch = max(8, int(block_batch))

    num_blocks = -(-B_pad8 // block_batch)
    if multicore:
        # Make sure both TensorCores get work (>= 2 blocks, prefer an even count).
        if num_blocks == 1 and B_pad8 >= 16:
            num_blocks = 2
        elif num_blocks > 1 and num_blocks % 2 == 1:
            num_blocks += 1
        block_batch = max(8, _round_up(-(-B_pad8 // num_blocks), 8))
        num_blocks = -(-B_pad8 // block_batch)

    B_pad = num_blocks * block_batch
    if B_pad != B:
        x2d = jnp.pad(x2d, ((0, B_pad - B), (0, 0)))   # zero rows -> zero out, sliced off

    # Static 0/1 summation matrix in the INPUT dtype (0/1 exact in bf16):
    # S[f*D + d, d] = 1  -> field reduction runs on the MXU as x2d @ S.
    S = (jnp.arange(FD, dtype=jnp.int32)[:, None] % D
         == jnp.arange(D, dtype=jnp.int32)[None, :]).astype(x.dtype)

    x_spec = pl.BlockSpec((block_batch, FD), lambda i: (i, 0))
    s_spec = pl.BlockSpec((FD, D), lambda i: (0, 0))   # constant index -> fetched once
    out_spec = pl.BlockSpec((block_batch, out_cols), lambda i: (i, 0))
    out_shape = jax.ShapeDtypeStruct((B_pad, out_cols), out_dtype)
    kernel = _fm_kernel_reduce if reduce_sum else _fm_kernel_no_reduce

    need = fixed_bytes + block_batch * per_row_bytes + headroom
    vmem_limit = int(min(vmem_cap, max(32 << 20, need)))

    if reduce_sum:
        flops = B_pad * (2 * FD * D + 4 * FD)
    else:
        flops = B_pad * (4 * FD * D + 3 * FD)
    cost = pl.CostEstimate(
        flops=int(flops),
        transcendentals=0,
        bytes_accessed=int(B_pad * FD * itemsize + FD * D * itemsize
                           + B_pad * out_cols * itemsize),
    )

    out = pl.pallas_call(
        kernel,
        out_shape=out_shape,
        grid_spec=pltpu.PrefetchScalarGridSpec(
            num_scalar_prefetch=0,
            grid=(num_blocks,),
            in_specs=[x_spec, s_spec],
            out_specs=out_spec,
        ),
        compiler_params=pltpu.CompilerParams(
            dimension_semantics=("parallel",),
            vmem_limit_bytes=vmem_limit,
        ),
        cost_estimate=cost,
    )(x2d, S)

    return out[:B]


def _fm_reference(x, reduce_sum=True):
    square_of_sum = jnp.sum(x, axis=1) ** 2
    sum_of_square = jnp.sum(x ** 2, axis=1)
    ix = square_of_sum - sum_of_square
    if reduce_sum:
        ix = jnp.sum(ix, axis=1, keepdims=True)
    return 0.5 * ix


if __name__ == "__main__":
    key = jax.random.PRNGKey(0)
    B, F, D = 16, 8, 32   # (batch, num_fields, embed_dim)
    x = jax.random.normal(key, (B, F, D), dtype=jnp.float32)

    # reduce_sum=True (module default), auto block sizing.
    out = jax.block_until_ready(factorization_machine(x, reduce_sum=True))
    ref = _fm_reference(x, reduce_sum=True)
    assert out.shape == (B, 1), out.shape
    assert jnp.allclose(out, ref, atol=1e-3, rtol=1e-4), float(jnp.max(jnp.abs(out - ref)))

    # Multi-block grid path (explicit small block -> 2 pipelined steps).
    out_mb = jax.block_until_ready(factorization_machine(x, reduce_sum=True, block_batch=8))
    assert out_mb.shape == (B, 1), out_mb.shape
    assert jnp.allclose(out_mb, ref, atol=1e-3, rtol=1e-4)

    # reduce_sum=False
    out2 = jax.block_until_ready(factorization_machine(x, reduce_sum=False))
    ref2 = _fm_reference(x, reduce_sum=False)
    assert out2.shape == (B, D), out2.shape
    assert jnp.allclose(out2, ref2, atol=1e-3, rtol=1e-4)

    # Ragged batch: exercises zero-padding + block rounding.
    B2 = 10
    x3 = jax.random.normal(jax.random.PRNGKey(1), (B2, F, D), dtype=jnp.float32)
    out3 = jax.block_until_ready(factorization_machine(x3, reduce_sum=True))
    ref3 = _fm_reference(x3, reduce_sum=True)
    assert out3.shape == (B2, 1), out3.shape
    assert jnp.allclose(out3, ref3, atol=1e-3, rtol=1e-4)

    # bf16 input: native bf16 MXU path with f32 accumulation (no whole-block upcast).
    xb = x.astype(jnp.bfloat16)
    outb = jax.block_until_ready(factorization_machine(xb, reduce_sum=True))
    refb = _fm_reference(xb.astype(jnp.float32), reduce_sum=True)
    assert outb.shape == (B, 1), outb.shape
    assert jnp.allclose(outb.astype(jnp.float32), refb, atol=1.0, rtol=5e-2)

    print("KERNEL_OK")
</pallas_src>

<mosaic_0001>
module attributes {stable_mosaic.version = 11 : i64} {
  func.func @_fm_kernel_reduce(%arg0: i32, %arg1: memref<16x256xf32, #tpu.memory_space<vmem>>, %arg2: memref<256x32xf32, #tpu.memory_space<vmem>>, %arg3: memref<16x1xf32, #tpu.memory_space<vmem>>) attributes {dimension_semantics = [#tpu.dimension_semantics<parallel>], iteration_bounds = array<i64: 1>, scalar_prefetch = 0 : i64, scratch_operands = 0 : i64, tpu.core_type = #tpu.core_type<tc>, window_params = [{transform_indices = @transform_0, window_bounds = array<i64: 16, 256>}, {pipeline_mode = #tpu.pipeline_mode<synchronous>, transform_indices = @transform_1, window_bounds = array<i64: 256, 32>}, {transform_indices = @transform_2, window_bounds = array<i64: 16, 1>}]} {
    %c0 = arith.constant 0 : index
    %c0_0 = arith.constant 0 : index
    %0 = vector.load %arg1[%c0, %c0_0] : memref<16x256xf32, #tpu.memory_space<vmem>>, vector<16x256xf32>
    %c0_1 = arith.constant 0 : index
    %c0_2 = arith.constant 0 : index
    %1 = vector.load %arg2[%c0_1, %c0_2] : memref<256x32xf32, #tpu.memory_space<vmem>>, vector<256x32xf32>
    %cst = arith.constant dense<0.000000e+00> : vector<16x32xf32>
    %2 = tpu.matmul %0, %1, %cst {dimension_numbers = #tpu.dot_dimension_numbers<[1], [0], [0], [1], [0, 0, 1, 1], [], []>} : vector<16x256xf32>, vector<256x32xf32>, vector<16x32xf32> -> vector<16x32xf32>
    %3 = arith.mulf %2, %2 : vector<16x32xf32>
    %cst_3 = arith.constant dense<0.000000e+00> : vector<16xf32>
    %4 = vector.multi_reduction <add>, %3, %cst_3 [1] : vector<16x32xf32> to vector<16xf32>
    %5 = vector.shape_cast %4 : vector<16xf32> to vector<16x1xf32>
    %6 = arith.mulf %0, %0 : vector<16x256xf32>
    %cst_4 = arith.constant dense<0.000000e+00> : vector<16xf32>
    %7 = vector.multi_reduction <add>, %6, %cst_4 [1] : vector<16x256xf32> to vector<16xf32>
    %8 = vector.shape_cast %7 : vector<16xf32> to vector<16x1xf32>
    %9 = arith.subf %5, %8 : vector<16x1xf32>
    %cst_5 = arith.constant 5.000000e-01 : f32
    %10 = vector.broadcast %cst_5 : f32 to vector<16x1xf32>
    %11 = arith.mulf %10, %9 : vector<16x1xf32>
    %c0_6 = arith.constant 0 : index
    %c0_7 = arith.constant 0 : index
    %12 = vector.load %arg3[%c0_6, %c0_7] : memref<16x1xf32, #tpu.memory_space<vmem>>, vector<16x1xf32>
    tpu.vector_store %arg3[%c0_6, %c0_7], %11 {strides = array<i32>} : memref<16x1xf32, #tpu.memory_space<vmem>>, vector<16x1xf32>,
    return
  }
  func.func @transform_0(%arg0: i32) -> (i32, i32) {
    %c0_i32 = arith.constant 0 : i32
    %c0_i32_0 = arith.constant 0 : i32
    return %arg0, %c0_i32 : i32, i32
  }
  func.func @transform_1(%arg0: i32) -> (i32, i32) {
    %c0_i32 = arith.constant 0 : i32
    %c0_i32_0 = arith.constant 0 : i32
    %c0_i32_1 = arith.constant 0 : i32
    return %c0_i32, %c0_i32_0 : i32, i32
  }
  func.func @transform_2(%arg0: i32) -> (i32, i32) {
    %c0_i32 = arith.constant 0 : i32
    %c0_i32_0 = arith.constant 0 : i32
    return %arg0, %c0_i32 : i32, i32
  }
}

</mosaic_0001>

<llo_original>
// kernel: tpu_custom_call.1
$region0: #{tpu_custom_call.1}
  #allocation0 [shape = 'u32[]', space=smem, size = 0x4, offset = 0x4, fixed_abs, tag = 'smem constant byte address 0x4 - core index']
  #allocation1 [shape = 'u32[144,128]{1,0:T(1,128)}', space=vmem, size = 0x12000, scoped, tag = 'internal scratch']
  %s0 = inlined_call_operand.vmem [shape: f32[16,256], index: 0, kind: input, shape index: {}]
  %s1 = inlined_call_operand.vmem [shape: f32[256,32], index: 1, kind: input, shape index: {}]
  %s2 = inlined_call_operand.vmem [shape: f32[16,1], index: 2, kind: output, shape index: {}]
  %s3 = sld [smem:[#allocation0]]
  $region18: #{tpu_custom_call.1} parent=0
    _
  %s5 = ssub.s32 1, %s3
  %s6 = scalar_select 0, %s5, %s3
  // Predicated region
  $region2: #{tpu_custom_call.1} parent=0 // pred_check
    _
  $region3: #{tpu_custom_call.1} parent=0 // pred_check_branch
    %8 = sbr.rel (0) target = $region5
  $region4: #{tpu_custom_call.1} parent=0 // pred_region
    _
  $region5: #{tpu_custom_call.1} parent=0 // pred_fallthru
    _
  // Predicated region
  $region6: #{tpu_custom_call.1} parent=0 // pred_check
    _
  $region7: #{tpu_custom_call.1} parent=0 // pred_check_branch
    %10 = sbr.rel (0) target = $region9
  $region8: #{tpu_custom_call.1} parent=0 // pred_region
    _
  $region9: #{tpu_custom_call.1} parent=0 // pred_fallthru
    _
  %v11 = vld [vmem:[%s0] sm:$0xff]
  %v12 = vld [vmem:[%s0 + $0x8] sm:$0xff]
  %v13 = vld [vmem:[%s0 + $0x10] sm:$0xff]
  %v14 = vld [vmem:[%s0 + $0x18] sm:$0xff]
  %v15 = vld [vmem:[%s1] sm:$0xff]
  %v16 = vld [vmem:[%s1 + $0x8] sm:$0xff]
  %v17 = vld [vmem:[%s1 + $0x10] sm:$0xff]
  %v18 = vld [vmem:[%s1 + $0x18] sm:$0xff]
  %v19 = vld [vmem:[%s1 + $0x20] sm:$0xff]
  %v20 = vld [vmem:[%s1 + $0x28] sm:$0xff]
  %v21 = vld [vmem:[%s1 + $0x30] sm:$0xff]
  %v22 = vld [vmem:[%s1 + $0x38] sm:$0xff]
  %v23 = vld [vmem:[%s1 + $0x40] sm:$0xff]
  %v24 = vld [vmem:[%s1 + $0x48] sm:$0xff]
  %v25 = vld [vmem:[%s1 + $0x50] sm:$0xff]
  %v26 = vld [vmem:[%s1 + $0x58] sm:$0xff]
  %v27 = vld [vmem:[%s1 + $0x60] sm:$0xff]
  %v28 = vld [vmem:[%s1 + $0x68] sm:$0xff]
  %v29 = vld [vmem:[%s1 + $0x70] sm:$0xff]
  %v30 = vld [vmem:[%s1 + $0x78] sm:$0xff]
  %v31 = vld [vmem:[%s1 + $0x80] sm:$0xff]
  %v32 = vld [vmem:[%s1 + $0x88] sm:$0xff]
  %v33 = vld [vmem:[%s1 + $0x90] sm:$0xff]
  %v34 = vld [vmem:[%s1 + $0x98] sm:$0xff]
  %v35 = vld [vmem:[%s1 + $0xa0] sm:$0xff]
  %v36 = vld [vmem:[%s1 + $0xa8] sm:$0xff]
  %v37 = vld [vmem:[%s1 + $0xb0] sm:$0xff]
  %v38 = vld [vmem:[%s1 + $0xb8] sm:$0xff]
  %v39 = vld [vmem:[%s1 + $0xc0] sm:$0xff]
  %v40 = vld [vmem:[%s1 + $0xc8] sm:$0xff]
  %v41 = vld [vmem:[%s1 + $0xd0] sm:$0xff]
  %v42 = vld [vmem:[%s1 + $0xd8] sm:$0xff]
  %v43 = vld [vmem:[%s1 + $0xe0] sm:$0xff]
  %v44 = vld [vmem:[%s1 + $0xe8] sm:$0xff]
  %v45 = vld [vmem:[%s1 + $0xf0] sm:$0xff]
  %v46 = vld [vmem:[%s1 + $0xf8] sm:$0xff]
  %47 = vmatprep.subr.mxu0 0.0
  %48 = vmatpush1.msra.mxu0 %v15
  %49 = vmatprep.subr.mxu0 0.0
  %50 = vmatpush1.msra.mxu0 %v16
  %51 = vmatprep.subr.mxu0 0.0
  %52 = vmatpush1.msra.mxu0 %v17
  %53 = vmatprep.subr.mxu0 0.0
  %54 = vmatpush1.msra.mxu0 %v18
  %55 = vmatprep.subr.mxu0 0.0
  %56 = vmatpush1.msra.mxu0 %v19
  %57 = vmatprep.subr.mxu0 0.0
  %58 = vmatpush1.msra.mxu0 %v20
  %59 = vmatprep.subr.mxu0 0.0
  %60 = vmatpush1.msra.mxu0 %v21
  %61 = vmatprep.subr.mxu0 0.0
  %62 = vmatpush1.msra.mxu0 %v22
  %63 = vmatprep.subr.mxu0 0.0
  %64 = vmatpush1.msra.mxu0 %v23
  %65 = vmatprep.subr.mxu0 0.0
  %66 = vmatpush1.msra.mxu0 %v24
  %67 = vmatprep.subr.mxu0 0.0
  %68 = vmatpush1.msra.mxu0 %v25
  %69 = vmatprep.subr.mxu0 0.0
  %70 = vmatpush1.msra.mxu0 %v26
  %71 = vmatprep.subr.mxu0 0.0
  %72 = vmatpush1.msra.mxu0 %v27
  %73 = vmatprep.subr.mxu0 0.0
  %74 = vmatpush1.msra.mxu0 %v28
  %75 = vmatprep.subr.mxu0 0.0
  %76 = vmatpush1.msra.mxu0 %v29
  %77 = vmatprep.subr.mxu0 0.0
  %78 = vmatpush1.msra.mxu0 %v30
  %79 = vmatprep.subr.mxu0 0.0
  %80 = vmatpush1.msra.mxu0 %v31
  %81 = vmatprep.subr.mxu0 0.0
  %82 = vmatpush1.msra.mxu0 %v32
  %83 = vmatprep.subr.mxu0 0.0
  %84 = vmatpush1.msra.mxu0 %v33
  %85 = vmatprep.subr.mxu0 0.0
  %86 = vmatpush1.msra.mxu0 %v34
  %87 = vmatprep.subr.mxu0 0.0
  %88 = vmatpush1.msra.mxu0 %v35
  %89 = vmatprep.subr.mxu0 0.0
  %90 = vmatpush1.msra.mxu0 %v36
  %91 = vmatprep.subr.mxu0 0.0
  %92 = vmatpush1.msra.mxu0 %v37
  %93 = vmatprep.subr.mxu0 0.0
  %94 = vmatpush1.msra.mxu0 %v38
  %95 = vmatprep.subr.mxu0 0.0
  %96 = vmatpush1.msra.mxu0 %v39
  %97 = vmatprep.subr.mxu0 0.0
  %98 = vmatpush1.msra.mxu0 %v40
  %99 = vmatprep.subr.mxu0 0.0
  %100 = vmatpush1.msra.mxu0 %v41
  %101 = vmatprep.subr.mxu0 0.0
  %102 = vmatpush1.msra.mxu0 %v42
  %103 = vmatprep.subr.mxu0 0.0
  %104 = vmatpush1.msra.mxu0 %v43
  %105 = vmatprep.subr.mxu0 0.0
  %106 = vmatpush1.msra.mxu0 %v44
  %107 = vmatprep.subr.mxu0 0.0
  %108 = vmatpush1.msra.mxu0 %v45
  %109 = vmatprep.subr.mxu0 0.0
  %110 = vmatpush1.msra.mxu0 %v46
  %111 = vmatprep.mubr.f32.mxu0 %v12
  %112 = vmatmul.mubr.f32.gmra.mrb[0].mxu0 %v11
  %v113 = vpop.f32.mrb[0].mxu0
  %v114 = vadd.f32 0.0, %v113
  %v115 = vpop.f32.mrb[0].mxu0
  %116 = vmatprep.mubr.f32.mxu0 %v14
  %117 = vmatmul.mubr.f32.gmra.mrb[0].mxu0 %v13
  %v118 = vpop.f32.mrb[0].mxu0
  %v119 = vadd.f32 0.0, %v118
  %v120 = vpop.f32.mrb[0].mxu0
  %121 = vdwg.mxu0
  %v122 = vmul.f32 %v114, %v114
  %v123 = vmul.f32 %v119, %v119
  %vm124 = vcmask 261120
  %v125 = vsel %vm124, %v122, 0.0
  %126 = vadd.xlane.f32.xlu0 %v125
  %v127 = vpop.xlane.xlu0 %126
  %v128 = vsel %vm124, %v123, 0.0
  %129 = vadd.xlane.f32.xlu0 %v128
  %v130 = vpop.xlane.xlu0 %129
  %v131 = vmul.f32 %v11, %v11
  %v132 = vmul.f32 %v12, %v12
  %v133 = vmul.f32 %v13, %v13
  %v134 = vmul.f32 %v14, %v14
  %v135 = vadd.f32 %v131, %v132
  %136 = vadd.xlane.f32.xlu0 %v135
  %v137 = vpop.xlane.xlu0 %136
  %v138 = vadd.f32 %v133, %v134
  %139 = vadd.xlane.f32.xlu0 %v138
  %v140 = vpop.xlane.xlu0 %139
  %v141 = vsub.f32 %v127, %v137
  %v142 = vsub.f32 %v130, %v140
  %v143 = vmul.f32 %v141, 0.5
  %v144 = vmul.f32 %v142, 0.5
  %vm145 = vcmask 7168
  %146 = vst.msk [vmem:[%s2] sm:$0xff] %vm145, %v143
  %147 = vst.msk [vmem:[%s2 + $0x8] sm:$0xff] %vm145, %v144
  // Predicated region
  $region10: #{tpu_custom_call.1} parent=0 // pred_check
    _
  $region11: #{tpu_custom_call.1} parent=0 // pred_check_branch
    %149 = sbr.rel (0) target = $region13
  $region12: #{tpu_custom_call.1} parent=0 // pred_region
    _
  $region13: #{tpu_custom_call.1} parent=0 // pred_fallthru
    _
  // Predicated region
  $region14: #{tpu_custom_call.1} parent=0 // pred_check
    _
  $region15: #{tpu_custom_call.1} parent=0 // pred_check_branch
    %151 = sbr.rel (0) target = $region17
  $region16: #{tpu_custom_call.1} parent=0 // pred_region
    _
  $region17: #{tpu_custom_call.1} parent=0 // pred_fallthru
    _

</llo_original>
